<compile_context>
chip_gen: v5e
topology: v5e:2x2
jax: 0.10.0
libtpu: 0.0.40
codegen_flags: <defaults>
</compile_context>

<pallas_src>
import functools

import jax
import jax.numpy as jnp
from jax.experimental import pallas as pl
from jax.experimental.pallas import tpu as pltpu

_NORMALIZE_EPS = 1e-12          # torch.nn.functional.normalize default eps
_NORMALIZE_EPS_SQ = _NORMALIZE_EPS * _NORMALIZE_EPS


def _round_up(x, m):
    return (x + m - 1) // m * m


def _vsv_kernel(x_ref, v_ref, o_ref):
    # x_ref: (tile_rows, d_pad) in input dtype; v_ref: (1, d_pad) f32, already lam-scaled.
    xf = x_ref[...].astype(jnp.float32)
    sumsq_x = jnp.sum(xf * xf, axis=-1, keepdims=True)          # (tile_rows, 1)
    y = xf + v_ref[...]                                         # (tile_rows, d_pad), f32
    sumsq_y = jnp.sum(y * y, axis=-1, keepdims=True)            # (tile_rows, 1)
    # out = y / max(||y||, eps) * ||x||  ==  y * (sqrt(sumsq_x) * rsqrt(max(sumsq_y, eps^2)))
    scale = jnp.sqrt(sumsq_x) * jax.lax.rsqrt(jnp.maximum(sumsq_y, _NORMALIZE_EPS_SQ))
    o_ref[...] = (y * scale).astype(o_ref.dtype)


def _pick_tile_rows(rows, d_pad, itemsize, row_align, vmem_budget_bytes,
                    max_tile_rows=1024):
    """Largest row tile (multiple of row_align, <= max_tile_rows) fitting the budget."""
    cap = min(max_tile_rows, _round_up(rows, row_align))
    tr = max(cap, row_align)
    while tr > row_align:
        per_step = (
            2 * tr * d_pad * (2 * itemsize)   # double-buffered in + out blocks
            + 2 * tr * d_pad * 4              # f32 temporaries (xf / y)
            + 2 * d_pad * 4                   # steering vector (tiny)
        )
        if per_step <= vmem_budget_bytes:
            break
        tr -= row_align
    return max(tr, row_align)


def vsv_layer(x, vsv_l, lam, *, tile_rows=None, vmem_budget_bytes=48 * 1024 * 1024):
    """Apply VSVLayer. x: [B, T, d], vsv_l: [d], lam: python float."""
    B, T, d = x.shape
    assert vsv_l.shape == (d,)

    in_dtype = x.dtype
    itemsize = jnp.dtype(in_dtype).itemsize
    # Sublane packing: f32 -> 8 rows/vreg, bf16/fp16 -> 16, int8/fp8 -> 32.
    row_align = max(8, 8 * (4 // max(itemsize, 1)))

    rows = B * T
    d_pad = _round_up(d, 128)     # lane-dense last dim -> unmasked vector stores

    if tile_rows is None:
        tile_rows = _pick_tile_rows(rows, d_pad, itemsize, row_align, vmem_budget_bytes)
    tile_rows = max(row_align, _round_up(int(tile_rows), row_align))

    rows_pad = _round_up(rows, tile_rows)

    x2 = x.reshape(rows, d)
    if rows_pad != rows or d_pad != d:
        x2 = jnp.pad(x2, ((0, rows_pad - rows), (0, d_pad - d)))

    # Fold lam into the steering vector once (removes a per-step multiply in-kernel).
    v2 = (jnp.float32(lam) * vsv_l.astype(jnp.float32)).reshape(1, d)
    if d_pad != d:
        v2 = jnp.pad(v2, ((0, 0), (0, d_pad - d)))

    grid = (rows_pad // tile_rows,)

    cost = pl.CostEstimate(
        flops=6 * rows_pad * d_pad,
        transcendentals=2 * rows_pad,
        bytes_accessed=2 * rows_pad * d_pad * itemsize + d_pad * 4,
    )

    out2 = pl.pallas_call(
        _vsv_kernel,
        out_shape=jax.ShapeDtypeStruct((rows_pad, d_pad), in_dtype),
        grid_spec=pltpu.PrefetchScalarGridSpec(
            num_scalar_prefetch=0,
            grid=grid,
            in_specs=[
                pl.BlockSpec((tile_rows, d_pad), lambda i: (i, 0)),  # x row-tile
                pl.BlockSpec((1, d_pad), lambda i: (0, 0)),          # lam * v (resident)
            ],
            out_specs=pl.BlockSpec((tile_rows, d_pad), lambda i: (i, 0)),
        ),
        compiler_params=pltpu.CompilerParams(
            dimension_semantics=("parallel",),
            vmem_limit_bytes=int(min(vmem_budget_bytes + (16 << 20), 96 << 20)),
        ),
        cost_estimate=cost,
    )(x2, v2)

    return out2[:rows, :d].reshape(B, T, d)


def _reference(x, vsv_l, lam):
    """Pure-JAX reference mirroring the PyTorch forward exactly."""
    orig_dtype = x.dtype
    xf = x.astype(jnp.float32)
    orig_norm = jnp.linalg.norm(xf, axis=-1, keepdims=True)
    y = xf + jnp.float32(lam) * vsv_l.astype(jnp.float32).reshape(1, 1, -1)
    new_norm = jnp.maximum(jnp.linalg.norm(y, axis=-1, keepdims=True), _NORMALIZE_EPS)
    return ((y / new_norm) * orig_norm).astype(orig_dtype)


def _check(x, vsv_l, lam, tol):
    out = jax.block_until_ready(vsv_layer(x, vsv_l, lam))
    ref = _reference(x, vsv_l, lam)
    assert out.shape == x.shape
    assert out.dtype == x.dtype
    err = float(jnp.max(jnp.abs(out.astype(jnp.float32) - ref.astype(jnp.float32))))
    assert err < tol, f"max abs error {err} (tol {tol})"


if __name__ == "__main__":
    lam = 0.5
    key = jax.random.PRNGKey(0)
    k1, k2, k3, k4 = jax.random.split(key, 4)

    # Case 1: lane-dense d (multiple of 128), bf16 activations.
    B, T, D = 2, 16, 256
    x_bf16 = jax.random.normal(k1, (B, T, D), dtype=jnp.float32).astype(jnp.bfloat16)
    v_bf16 = jax.random.normal(k2, (D,), dtype=jnp.float32)
    _check(x_bf16, v_bf16, lam, tol=5e-2)

    # Case 2: small non-128-aligned d (exercises lane/row padding path), f32.
    B2, T2, D2 = 2, 8, 32
    x_f32 = jax.random.normal(k3, (B2, T2, D2), dtype=jnp.float32)
    v_f32 = jax.random.normal(k4, (D2,), dtype=jnp.float32)
    _check(x_f32, v_f32, lam, tol=1e-4)

    print("KERNEL_OK")
</pallas_src>

<mosaic_0001>
module attributes {stable_mosaic.version = 11 : i64} {
  func.func @_vsv_kernel(%arg0: i32, %arg1: memref<32x256xbf16, #tpu.memory_space<vmem>>, %arg2: memref<1x256xf32, #tpu.memory_space<vmem>>, %arg3: memref<32x256xbf16, #tpu.memory_space<vmem>>) attributes {dimension_semantics = [#tpu.dimension_semantics<parallel>], iteration_bounds = array<i64: 1>, scalar_prefetch = 0 : i64, scratch_operands = 0 : i64, tpu.core_type = #tpu.core_type<tc>, window_params = [{transform_indices = @transform_0, window_bounds = array<i64: 32, 256>}, {pipeline_mode = #tpu.pipeline_mode<synchronous>, transform_indices = @transform_1, window_bounds = array<i64: 1, 256>}, {transform_indices = @transform_2, window_bounds = array<i64: 32, 256>}]} {
    %c0 = arith.constant 0 : index
    %c0_0 = arith.constant 0 : index
    %0 = vector.load %arg1[%c0, %c0_0] : memref<32x256xbf16, #tpu.memory_space<vmem>>, vector<32x256xbf16>
    %1 = arith.extf %0 : vector<32x256xbf16> to vector<32x256xf32>
    %2 = arith.mulf %1, %1 : vector<32x256xf32>
    %cst = arith.constant dense<0.000000e+00> : vector<32xf32>
    %3 = vector.multi_reduction <add>, %2, %cst [1] : vector<32x256xf32> to vector<32xf32>
    %4 = vector.shape_cast %3 : vector<32xf32> to vector<32x1xf32>
    %c0_1 = arith.constant 0 : index
    %c0_2 = arith.constant 0 : index
    %5 = vector.load %arg2[%c0_1, %c0_2] : memref<1x256xf32, #tpu.memory_space<vmem>>, vector<1x256xf32>
    %6 = vector.broadcast %5 : vector<1x256xf32> to vector<32x256xf32>
    %7 = arith.addf %1, %6 : vector<32x256xf32>
    %8 = arith.mulf %7, %7 : vector<32x256xf32>
    %cst_3 = arith.constant dense<0.000000e+00> : vector<32xf32>
    %9 = vector.multi_reduction <add>, %8, %cst_3 [1] : vector<32x256xf32> to vector<32xf32>
    %10 = vector.shape_cast %9 : vector<32xf32> to vector<32x1xf32>
    %11 = math.sqrt %4 : vector<32x1xf32>
    %cst_4 = arith.constant 1.000000e-24 : f32
    %12 = vector.broadcast %cst_4 : f32 to vector<32x1xf32>
    %13 = arith.maximumf %10, %12 : vector<32x1xf32>
    %14 = math.rsqrt %13 : vector<32x1xf32>
    %15 = arith.mulf %11, %14 : vector<32x1xf32>
    %16 = vector.broadcast %15 : vector<32x1xf32> to vector<32x256xf32>
    %17 = arith.mulf %7, %16 : vector<32x256xf32>
    %18 = arith.truncf %17 : vector<32x256xf32> to vector<32x256xbf16>
    %c0_5 = arith.constant 0 : index
    %c0_6 = arith.constant 0 : index
    %19 = vector.load %arg3[%c0_5, %c0_6] : memref<32x256xbf16, #tpu.memory_space<vmem>>, vector<32x256xbf16>
    tpu.vector_store %arg3[%c0_5, %c0_6], %18 {strides = array<i32>} : memref<32x256xbf16, #tpu.memory_space<vmem>>, vector<32x256xbf16>,
    return
  }
  func.func @transform_0(%arg0: i32) -> (i32, i32) {
    %c0_i32 = arith.constant 0 : i32
    %c0_i32_0 = arith.constant 0 : i32
    return %arg0, %c0_i32 : i32, i32
  }
  func.func @transform_1(%arg0: i32) -> (i32, i32) {
    %c0_i32 = arith.constant 0 : i32
    %c0_i32_0 = arith.constant 0 : i32
    %c0_i32_1 = arith.constant 0 : i32
    return %c0_i32, %c0_i32_0 : i32, i32
  }
  func.func @transform_2(%arg0: i32) -> (i32, i32) {
    %c0_i32 = arith.constant 0 : i32
    %c0_i32_0 = arith.constant 0 : i32
    return %arg0, %c0_i32 : i32, i32
  }
}

</mosaic_0001>

<llo_original>
// kernel: tpu_custom_call.1
$region0: #{tpu_custom_call.1}
  #allocation0 [shape = 'u32[]', space=smem, size = 0x4, offset = 0x4, fixed_abs, tag = 'smem constant byte address 0x4 - core index']
  #allocation1 [shape = 'u32[72,128]{1,0:T(1,128)}', space=vmem, size = 0x9000, scoped, tag = 'internal scratch']
  %s0 = inlined_call_operand.hbm [shape: bf16[32,256], index: 0, kind: input, shape index: {}]
  %s1 = inlined_call_operand.hbm [shape: f32[1,256], index: 1, kind: input, shape index: {}]
  %s2 = inlined_call_operand.hbm [shape: bf16[32,256], index: 2, kind: output, shape index: {}]
  %s3 = sld [smem:[#allocation0]]
  $region26: #{tpu_custom_call.1} parent=0
    _
  %s5 = ssub.s32 1, %s3
  %s6 = scalar_select 0, %s5, %s3
  $region1: #{tpu_custom_call.1} parent=0
    #allocation2 [shape = 'u8[16384]{0}', space=vmem, size = 0x4000, scoped, tag = 'input window, operand 0, single buffered']
    #allocation3 [shape = 's32[1]{0}', space=sflag, size = 0x4, scoped, tag = 'scoped memory for tpu_custom_call.1']
    #allocation4 [shape = 's32[1]{0}', space=sflag, size = 0x4, scoped, tag = 'scoped memory for tpu_custom_call.1']
    #allocation5 [shape = 'u8[1024]{0}', space=vmem, size = 0x400, scoped, tag = 'input window, operand 1, single buffered']
    #allocation6 [shape = 's32[1]{0}', space=sflag, size = 0x4, scoped, tag = 'scoped memory for tpu_custom_call.1']
    #allocation7 [shape = 'u8[16384]{0}', space=vmem, size = 0x4000, scoped, tag = 'output window, operand 0, single buffered']
    %7 = vsyncpa [#allocation3], 0
    %8 = vsyncpa [#allocation6], 0
    %9 = vsyncpa [#allocation4], 0
    // Predicated region
    $region2: #{tpu_custom_call.1} parent=1 // pred_check
      _
    $region3: #{tpu_custom_call.1} parent=1 // pred_check_branch
      %11 = sbr.rel (0) target = $region5
    $region4: #{tpu_custom_call.1} parent=1 // pred_region
      %13 = vsyncadd [#allocation3], 0
      %s14 = sshll.u32 %s0, 4
      %s15 = int_to_ptr.hbm [resolvable:$true] %s14
      %s16 = sshll.u32 [#allocation2], 4
      %s17 = int_to_ptr.vmem [resolvable:$true] %s16
      %22 = dma.hbm_to_vmem [thread:$0]  %s15, 512, %s17, [#allocation3], 128, 128, 8
    $region5: #{tpu_custom_call.1} parent=1 // pred_fallthru
      _
    // Predicated region
    $region6: #{tpu_custom_call.1} parent=1 // pred_check
      _
    $region7: #{tpu_custom_call.1} parent=1 // pred_check_branch
      %24 = sbr.rel (0) target = $region9
    $region8: #{tpu_custom_call.1} parent=1 // pred_region
      %26 = vsyncadd [#allocation6], 0
      %s28 = sshll.u32 %s1, 4
      %s29 = int_to_ptr.hbm [resolvable:$true] %s28
      %s30 = sshll.u32 [#allocation5], 4
      %s31 = int_to_ptr.vmem [resolvable:$true] %s30
      %33 = dma.hbm_to_vmem [thread:$0]  %s29, 32, %s31, [#allocation6]
    $region9: #{tpu_custom_call.1} parent=1 // pred_fallthru
      _
    // Predicated region
    $region10: #{tpu_custom_call.1} parent=1 // pred_check
      _
    $region11: #{tpu_custom_call.1} parent=1 // pred_check_branch
      %35 = sbr.rel (0) target = $region13
    $region12: #{tpu_custom_call.1} parent=1 // pred_region
      %37 = dma.done [#allocation3], 512
    $region13: #{tpu_custom_call.1} parent=1 // pred_fallthru
      _
    // Predicated region
    $region14: #{tpu_custom_call.1} parent=1 // pred_check
      _
    $region15: #{tpu_custom_call.1} parent=1 // pred_check_branch
      %39 = sbr.rel (0) target = $region17
    $region16: #{tpu_custom_call.1} parent=1 // pred_region
      %41 = dma.done [#allocation6], 32
    $region17: #{tpu_custom_call.1} parent=1 // pred_fallthru
      _
    %v42 = vld [vmem:[#allocation2] sm:$0xff]
    %v43 = vld [vmem:[#allocation2 + $0x8] sm:$0xff]
    %v44 = vld [vmem:[#allocation2 + $0x10] sm:$0xff]
    %v45 = vld [vmem:[#allocation2 + $0x18] sm:$0xff]
    %v46 = vunpack.c.l.bf16 %v42
    %v47 = vunpack.c.h.bf16 %v42
    %v48 = vunpack.c.l.bf16 %v43
    %v49 = vunpack.c.h.bf16 %v43
    %v50 = vunpack.c.l.bf16 %v44
    %v51 = vunpack.c.h.bf16 %v44
    %v52 = vunpack.c.l.bf16 %v45
    %v53 = vunpack.c.h.bf16 %v45
    %v54 = vmul.f32 %v46, %v46
    %v55 = vmul.f32 %v47, %v47
    %v56 = vmul.f32 %v48, %v48
    %v57 = vmul.f32 %v49, %v49
    %v58 = vmul.f32 %v50, %v50
    %v59 = vmul.f32 %v51, %v51
    %v60 = vmul.f32 %v52, %v52
    %v61 = vmul.f32 %v53, %v53
    %v62 = vadd.f32 %v54, %v55
    %63 = vadd.xlane.f32.xlu0 %v62
    %v64 = vpop.xlane.xlu0 %63
    %v65 = vadd.f32 %v56, %v57
    %66 = vadd.xlane.f32.xlu0 %v65
    %v67 = vpop.xlane.xlu0 %66
    %v68 = vadd.f32 %v58, %v59
    %69 = vadd.xlane.f32.xlu0 %v68
    %v70 = vpop.xlane.xlu0 %69
    %v71 = vadd.f32 %v60, %v61
    %72 = vadd.xlane.f32.xlu0 %v71
    %v73 = vpop.xlane.xlu0 %72
    %v74 = vld [vmem:[#allocation5] sm:$0x3]
    %v76 = vperm.slane %v74, 0
    %v77 = vperm.slane %v74, 1
    %v80 = vadd.f32 %v46, %v76
    %v81 = vadd.f32 %v47, %v77
    %v82 = vadd.f32 %v48, %v76
    %v83 = vadd.f32 %v49, %v77
    %v84 = vadd.f32 %v50, %v76
    %v85 = vadd.f32 %v51, %v77
    %v86 = vadd.f32 %v52, %v76
    %v87 = vadd.f32 %v53, %v77
    %v88 = vmul.f32 %v80, %v80
    %v89 = vmul.f32 %v81, %v81
    %v90 = vmul.f32 %v82, %v82
    %v91 = vmul.f32 %v83, %v83
    %v92 = vmul.f32 %v84, %v84
    %v93 = vmul.f32 %v85, %v85
    %v94 = vmul.f32 %v86, %v86
    %v95 = vmul.f32 %v87, %v87
    %v96 = vadd.f32 %v88, %v89
    %97 = vadd.xlane.f32.xlu0 %v96
    %v98 = vpop.xlane.xlu0 %97
    %v99 = vadd.f32 %v90, %v91
    %100 = vadd.xlane.f32.xlu0 %v99
    %v101 = vpop.xlane.xlu0 %100
    %v102 = vadd.f32 %v92, %v93
    %103 = vadd.xlane.f32.xlu0 %v102
    %v104 = vpop.xlane.xlu0 %103
    %v105 = vadd.f32 %v94, %v95
    %106 = vadd.xlane.f32.xlu0 %v105
    %v107 = vpop.xlane.xlu0 %106
    %v108 = vrsqrt.pop %v64
    %v109 = vmul.f32 %v108, %v64
    %v110 = vmul.f32 %v109, %v108
    %v111 = vmul.f32 0.5, %v110
    %v112 = vsub.f32 1.5, %v111
    %v113 = vmul.f32 %v108, %v112
    %v114 = vmul.f32 %v64, %v113
    %vm115 = vcmp.eq.f32.partialorder %v64, inf
    %v116 = vsel %vm115, %v64, %v114
    %vm117 = vcmp.eq.f32.partialorder %v64, 0.0
    %v118 = vand.u32 %v64, 2147483648
    %v119 = vsel %vm117, %v118, %v116
    %v120 = vrsqrt.pop %v67
    %v121 = vmul.f32 %v120, %v67
    %v122 = vmul.f32 %v121, %v120
    %v123 = vmul.f32 0.5, %v122
    %v124 = vsub.f32 1.5, %v123
    %v125 = vmul.f32 %v120, %v124
    %v126 = vmul.f32 %v67, %v125
    %vm127 = vcmp.eq.f32.partialorder %v67, inf
    %v128 = vsel %vm127, %v67, %v126
    %vm129 = vcmp.eq.f32.partialorder %v67, 0.0
    %v130 = vand.u32 %v67, 2147483648
    %v131 = vsel %vm129, %v130, %v128
    %v132 = vrsqrt.pop %v70
    %v133 = vmul.f32 %v132, %v70
    %v134 = vmul.f32 %v133, %v132
    %v135 = vmul.f32 0.5, %v134
    %v136 = vsub.f32 1.5, %v135
    %v137 = vmul.f32 %v132, %v136
    %v138 = vmul.f32 %v70, %v137
    %vm139 = vcmp.eq.f32.partialorder %v70, inf
    %v140 = vsel %vm139, %v70, %v138
    %vm141 = vcmp.eq.f32.partialorder %v70, 0.0
    %v142 = vand.u32 %v70, 2147483648
    %v143 = vsel %vm141, %v142, %v140
    %v144 = vrsqrt.pop %v73
    %v145 = vmul.f32 %v144, %v73
    %v146 = vmul.f32 %v145, %v144
    %v147 = vmul.f32 0.5, %v146
    %v148 = vsub.f32 1.5, %v147
    %v149 = vmul.f32 %v144, %v148
    %v150 = vmul.f32 %v73, %v149
    %vm151 = vcmp.eq.f32.partialorder %v73, inf
    %v152 = vsel %vm151, %v73, %v150
    %vm153 = vcmp.eq.f32.partialorder %v73, 0.0
    %v154 = vand.u32 %v73, 2147483648
    %v155 = vsel %vm153, %v154, %v152
    %v156 = vmax.f32 %v98, 1e-24
    %v157 = vmax.f32 %v101, 1e-24
    %v158 = vmax.f32 %v104, 1e-24
    %v159 = vmax.f32 %v107, 1e-24
    %v160 = vrsqrt.pop %v156
    %v161 = vmul.f32 %v160, %v156
    %v162 = vmul.f32 %v161, %v160
    %v163 = vmul.f32 0.5, %v162
    %v164 = vsub.f32 1.5, %v163
    %v165 = vmul.f32 %v160, %v164
    %vm166 = vweird.f32 %v156
    %vm167 = vweird.f32 %v160
    %vm168 = vmor %vm166, %vm167
    %v169 = vsel %vm168, %v160, %v165
    %v170 = vrsqrt.pop %v157
    %v171 = vmul.f32 %v170, %v157
    %v172 = vmul.f32 %v171, %v170
    %v173 = vmul.f32 0.5, %v172
    %v174 = vsub.f32 1.5, %v173
    %v175 = vmul.f32 %v170, %v174
    %vm176 = vweird.f32 %v157
    %vm177 = vweird.f32 %v170
    %vm178 = vmor %vm176, %vm177
    %v179 = vsel %vm178, %v170, %v175
    %v180 = vrsqrt.pop %v158
    %v181 = vmul.f32 %v180, %v158
    %v182 = vmul.f32 %v181, %v180
    %v183 = vmul.f32 0.5, %v182
    %v184 = vsub.f32 1.5, %v183
    %v185 = vmul.f32 %v180, %v184
    %vm186 = vweird.f32 %v158
    %vm187 = vweird.f32 %v180
    %vm188 = vmor %vm186, %vm187
    %v189 = vsel %vm188, %v180, %v185
    %v190 = vrsqrt.pop %v159
    %v191 = vmul.f32 %v190, %v159
    %v192 = vmul.f32 %v191, %v190
    %v193 = vmul.f32 0.5, %v192
    %v194 = vsub.f32 1.5, %v193
    %v195 = vmul.f32 %v190, %v194
    %vm196 = vweird.f32 %v159
    %vm197 = vweird.f32 %v190
    %vm198 = vmor %vm196, %vm197
    %v199 = vsel %vm198, %v190, %v195
    %v200 = vmul.f32 %v119, %v169
    %v201 = vmul.f32 %v131, %v179
    %v202 = vmul.f32 %v143, %v189
    %v203 = vmul.f32 %v155, %v199
    %v204 = vmul.f32 %v80, %v200
    %v205 = vmul.f32 %v81, %v200
    %v206 = vmul.f32 %v82, %v201
    %v207 = vmul.f32 %v83, %v201
    %v208 = vmul.f32 %v84, %v202
    %v209 = vmul.f32 %v85, %v202
    %v210 = vmul.f32 %v86, %v203
    %v211 = vmul.f32 %v87, %v203
    %v212 = vpack.c.bf16 %v205, %v204
    %v213 = vpack.c.bf16 %v207, %v206
    %v214 = vpack.c.bf16 %v209, %v208
    %v215 = vpack.c.bf16 %v211, %v210
    %216 = vst [vmem:[#allocation7] sm:$0xff] %v212
    %217 = vst [vmem:[#allocation7 + $0x8] sm:$0xff] %v213
    %218 = vst [vmem:[#allocation7 + $0x10] sm:$0xff] %v214
    %219 = vst [vmem:[#allocation7 + $0x18] sm:$0xff] %v215
    // Predicated region
    $region18: #{tpu_custom_call.1} parent=1 // pred_check
      _
    $region19: #{tpu_custom_call.1} parent=1 // pred_check_branch
      %221 = sbr.rel (0) target = $region21
    $region20: #{tpu_custom_call.1} parent=1 // pred_region
      %223 = vsyncadd [#allocation4], 0
      %s224 = sshll.u32 [#allocation7], 4
      %s225 = int_to_ptr.vmem [resolvable:$true] %s224
      %s226 = sshll.u32 %s2, 4
      %s227 = int_to_ptr.hbm [resolvable:$true] %s226
      %232 = dma.vmem_to_hbm [thread:$0]  %s225, 512, %s227, [#allocation4], 128, 128, 8
    $region21: #{tpu_custom_call.1} parent=1 // pred_fallthru
      _
    // Predicated region
    $region22: #{tpu_custom_call.1} parent=1 // pred_check
      _
    $region23: #{tpu_custom_call.1} parent=1 // pred_check_branch
      %234 = sbr.rel (0) target = $region25
    $region24: #{tpu_custom_call.1} parent=1 // pred_region
      %236 = dma.done [#allocation4], 512
    $region25: #{tpu_custom_call.1} parent=1 // pred_fallthru
      _
    %237 = vsyncpa [#allocation3], 1
    %238 = vsyncpa [#allocation6], 1
    %239 = vsyncpa [#allocation4], 1

</llo_original>
